<compile_context>
chip_gen: v7x
topology: tpu7x:2x2x1
jax: 0.10.0
libtpu: 0.0.40
codegen_flags: <defaults>
</compile_context>

<pallas_src>
import functools

import jax
import jax.numpy as jnp
from jax.experimental import pallas as pl
from jax.experimental.pallas import tpu as pltpu


def _patch_embed_kernel(p_ref, w_ref, b_ref, o_ref):
    # p_ref: (TM, K) patches (bf16), w_ref: (K, E) weight (bf16),
    # b_ref: (1, E) bias (f32), o_ref: (TM, E) output (x.dtype).
    acc = jnp.dot(p_ref[...], w_ref[...], preferred_element_type=jnp.float32)
    o_ref[...] = (acc + b_ref[...]).astype(o_ref.dtype)


def patch_embed(x, weight, bias, kernel_size=(4, 4), stride=(4, 4),
                *, compute_dtype=jnp.bfloat16, tile_m=1024):
    """x: (B, C, H, W). weight: (E, C, kh, kw). bias: (E,).

    Returns (B, Hp, Wp, E), matching PatchEmbed.forward (conv + permute 0,2,3,1).
    """
    B, C, H, W = x.shape
    kh, kw = kernel_size
    sh, sw = stride
    assert (kh, kw) == (sh, sw), "PatchEmbed uses kernel_size == stride"
    assert H % kh == 0 and W % kw == 0
    Hp, Wp = H // kh, W // kw
    E = weight.shape[0]
    K = C * kh * kw
    M = B * Hp * Wp

    # --- glue: unfold NCHW into patch rows with (c, kh, kw) ordering ---
    # (B, C, Hp, kh, Wp, kw) -> (B, Hp, Wp, C, kh, kw) -> (M, K)
    # Fusible into the pallas_call input pipeline (allow_input_fusion below).
    patches = x.reshape(B, C, Hp, kh, Wp, kw)
    patches = jnp.transpose(patches, (0, 2, 4, 1, 3, 5)).reshape(M, K)
    patches = patches.astype(compute_dtype)

    # conv weight (E, C, kh, kw) -> (K, E), flatten order matches patches.
    w2d = weight.reshape(E, K).T.astype(compute_dtype)
    b2d = bias.reshape(1, E).astype(jnp.float32)

    # M-tiling: one lane-dense (TM, E) output tile per grid step.
    # tile_m is a multiple of 256 (MXU cadence / bf16 sublane packing); if the
    # whole problem is smaller than one tile, use the full dim (always legal).
    if M <= tile_m:
        tm = M
    else:
        tm = tile_m  # ragged tail is handled by Pallas' masked edge stores
    grid_m = pl.cdiv(M, tm)

    out = pl.pallas_call(
        _patch_embed_kernel,
        out_shape=jax.ShapeDtypeStruct((M, E), x.dtype),
        grid_spec=pltpu.PrefetchScalarGridSpec(
            num_scalar_prefetch=0,
            grid=(grid_m,),
            in_specs=[
                pl.BlockSpec((tm, K), lambda i: (i, 0)),   # patches: tiled on M
                pl.BlockSpec((K, E), lambda i: (0, 0)),    # weight: resident
                pl.BlockSpec((1, E), lambda i: (0, 0)),    # bias: resident
            ],
            out_specs=pl.BlockSpec((tm, E), lambda i: (i, 0)),  # lane-dense (E=full)
        ),
        compiler_params=pltpu.CompilerParams(
            # Independent M tiles -> shard across both TensorCores on v7x.
            dimension_semantics=("parallel",),
            # Explicit budget: fits v7x's 64 MiB physical VMEM with headroom.
            vmem_limit_bytes=48 * 1024 * 1024,
            # Let XLA fuse the unfold/transpose + bf16 cast into the input DMA
            # pipeline instead of materializing `patches` in HBM.
            allow_input_fusion=[True, True, True],
        ),
    )(patches, w2d, b2d)

    return out.reshape(B, Hp, Wp, E)


if __name__ == "__main__":
    # Small shapes consistent with the module: in_chans=3, patch=4, embed_dim=128
    B, C, H, W = 2, 3, 16, 16
    kh = kw = 4
    E = 128

    key = jax.random.PRNGKey(0)
    kx, kwt, kb = jax.random.split(key, 3)
    x = jax.random.normal(kx, (B, C, H, W), dtype=jnp.float32)
    weight = jax.random.normal(kwt, (E, C, kh, kw), dtype=jnp.float32) * 0.02
    bias = jax.random.normal(kb, (E,), dtype=jnp.float32) * 0.02

    fn = jax.jit(functools.partial(patch_embed, kernel_size=(kh, kw),
                                   stride=(kh, kw)))
    out = fn(x, weight, bias)
    out = jax.block_until_ready(out)

    # reference: lax conv (same semantics as nn.Conv2d) + permute to NHWC
    ref = jax.lax.conv_general_dilated(
        x, weight, window_strides=(kh, kw), padding="VALID",
        dimension_numbers=("NCHW", "OIHW", "NCHW"))
    ref = jnp.transpose(ref + bias.reshape(1, E, 1, 1), (0, 2, 3, 1))

    assert out.shape == (B, H // kh, W // kw, E)
    # bf16 matmul inputs (f32 accumulation) -> loose tolerance vs. f32 reference
    assert jnp.allclose(out, ref, atol=2e-2, rtol=2e-2), float(
        jnp.max(jnp.abs(out - ref)))

    print("KERNEL_OK")
</pallas_src>

<mosaic_0001>
module attributes {stable_mosaic.version = 11 : i64} {
  func.func @_patch_embed_kernel(%arg0: i32, %arg1: memref<32x48xbf16, #tpu.memory_space<vmem>>, %arg2: memref<48x128xbf16, #tpu.memory_space<vmem>>, %arg3: memref<1x128xf32, #tpu.memory_space<vmem>>, %arg4: memref<32x128xf32, #tpu.memory_space<vmem>>) attributes {dimension_semantics = [#tpu.dimension_semantics<parallel>], iteration_bounds = array<i64: 1>, scalar_prefetch = 0 : i64, scratch_operands = 0 : i64, tpu.core_type = #tpu.core_type<tc>, window_params = [{transform_indices = @transform_0, window_bounds = array<i64: 32, 48>}, {pipeline_mode = #tpu.pipeline_mode<synchronous>, transform_indices = @transform_1, window_bounds = array<i64: 48, 128>}, {pipeline_mode = #tpu.pipeline_mode<synchronous>, transform_indices = @transform_2, window_bounds = array<i64: 1, 128>}, {transform_indices = @transform_3, window_bounds = array<i64: 32, 128>}]} {
    %c0 = arith.constant 0 : index
    %c0_0 = arith.constant 0 : index
    %0 = vector.load %arg1[%c0, %c0_0] : memref<32x48xbf16, #tpu.memory_space<vmem>>, vector<32x48xbf16>
    %c0_1 = arith.constant 0 : index
    %c0_2 = arith.constant 0 : index
    %1 = vector.load %arg2[%c0_1, %c0_2] : memref<48x128xbf16, #tpu.memory_space<vmem>>, vector<48x128xbf16>
    %cst = arith.constant dense<0.000000e+00> : vector<32x128xf32>
    %2 = tpu.matmul %0, %1, %cst {dimension_numbers = #tpu.dot_dimension_numbers<[1], [0], [0], [1], [0, 0, 1, 1], [], []>} : vector<32x48xbf16>, vector<48x128xbf16>, vector<32x128xf32> -> vector<32x128xf32>
    %c0_3 = arith.constant 0 : index
    %c0_4 = arith.constant 0 : index
    %3 = vector.load %arg3[%c0_3, %c0_4] : memref<1x128xf32, #tpu.memory_space<vmem>>, vector<1x128xf32>
    %4 = vector.broadcast %3 : vector<1x128xf32> to vector<32x128xf32>
    %5 = arith.addf %2, %4 : vector<32x128xf32>
    %c0_5 = arith.constant 0 : index
    %c0_6 = arith.constant 0 : index
    %6 = vector.load %arg4[%c0_5, %c0_6] : memref<32x128xf32, #tpu.memory_space<vmem>>, vector<32x128xf32>
    tpu.vector_store %arg4[%c0_5, %c0_6], %5 {strides = array<i32>} : memref<32x128xf32, #tpu.memory_space<vmem>>, vector<32x128xf32>,
    return
  }
  func.func @transform_0(%arg0: i32) -> (i32, i32) {
    %c0_i32 = arith.constant 0 : i32
    %c0_i32_0 = arith.constant 0 : i32
    return %arg0, %c0_i32 : i32, i32
  }
  func.func @transform_1(%arg0: i32) -> (i32, i32) {
    %c0_i32 = arith.constant 0 : i32
    %c0_i32_0 = arith.constant 0 : i32
    %c0_i32_1 = arith.constant 0 : i32
    return %c0_i32, %c0_i32_0 : i32, i32
  }
  func.func @transform_2(%arg0: i32) -> (i32, i32) {
    %c0_i32 = arith.constant 0 : i32
    %c0_i32_0 = arith.constant 0 : i32
    %c0_i32_1 = arith.constant 0 : i32
    return %c0_i32, %c0_i32_0 : i32, i32
  }
  func.func @transform_3(%arg0: i32) -> (i32, i32) {
    %c0_i32 = arith.constant 0 : i32
    %c0_i32_0 = arith.constant 0 : i32
    return %arg0, %c0_i32 : i32, i32
  }
}

</mosaic_0001>

<llo_original>
// kernel: patch_embed.2
$region0: #{patch_embed.2}
  #allocation0 [shape = 'u32[]', space=smem, size = 0x4, offset = 0x4, fixed_abs, tag = 'smem constant byte address 0x4 - core index']
  #allocation1 [shape = 'u32[144,128]{1,0:T(1,128)}', space=vmem, size = 0x12000, scoped, tag = 'internal scratch']
  %s0 = inlined_call_operand.vmem [shape: bf16[32,48], index: 0, kind: input, shape index: {}]
  %s1 = inlined_call_operand.vmem [shape: bf16[48,128], index: 1, kind: input, shape index: {}]
  %s2 = inlined_call_operand.vmem [shape: f32[128], index: 2, kind: input, shape index: {}]
  %s3 = inlined_call_operand.hbm [shape: f32[32,128], index: 3, kind: output, shape index: {}]
  %s4 = sld [smem:[#allocation0]]
  $region22: #{patch_embed.2} parent=0
    _
  %s6 = ssub.s32 1, %s4
  %s7 = scalar_select 0, %s6, %s4
  $region1: #{patch_embed.2} parent=0
    #allocation2 [shape = 'u8[16384]{0}', space=vmem, size = 0x4000, scoped, tag = 'output window, operand 0, single buffered']
    #allocation3 [shape = 's32[1]{0}', space=sflag, size = 0x4, scoped, tag = 'scoped memory for patch_embed.2']
    #allocation4 [shape = 'u8[512]{0}', space=vmem, size = 0x400, dematerialized = true, scoped, tag = 'FusionAdapter Buffer %fusion.1 = f32[1,128]{1,0:T(1,128)} fusion(%param_2.1), kind=kLoop, calls=%fused_computation.2.clone, metadata={op_name="jit(patch_embed)/reshape" stack_frame_id=11}']
    %8 = vsyncpa [#allocation3], 0
    // Predicated region
    $region2: #{patch_embed.2} parent=1 // pred_check
      _
    $region3: #{patch_embed.2} parent=1 // pred_check_branch
      %10 = sbr.rel (0) target = $region5
    $region4: #{patch_embed.2} parent=1 // pred_region
      _
    $region5: #{patch_embed.2} parent=1 // pred_fallthru
      _
    // Predicated region
    $region6: #{patch_embed.2} parent=1 // pred_check
      _
    $region7: #{patch_embed.2} parent=1 // pred_check_branch
      %12 = sbr.rel (0) target = $region9
    $region8: #{patch_embed.2} parent=1 // pred_region
      _
    $region9: #{patch_embed.2} parent=1 // pred_fallthru
      _
    // Predicated region
    $region10: #{patch_embed.2} parent=1 // pred_check
      _
    $region11: #{patch_embed.2} parent=1 // pred_check_branch
      %14 = sbr.rel (0) target = $region13
    $region12: #{patch_embed.2} parent=1 // pred_region
      _
    $region13: #{patch_embed.2} parent=1 // pred_fallthru
      _
    %v15 = vld [vmem:[%s2] sm:$0x1]
    %17 = vst [vmem:[#allocation4] sm:$0x1] %v15
    %v19 = vld [vmem:[%s0] sm:$0xf]
    %v20 = vld [vmem:[%s0 + $0x4] sm:$0xf]
    %v21 = vld [vmem:[%s0 + $0x8] sm:$0xf]
    %v22 = vld [vmem:[%s0 + $0xc] sm:$0xf]
    %v23 = vld [vmem:[%s1] sm:$0xf]
    %v24 = vld [vmem:[%s1 + $0x4] sm:$0xf]
    %v25 = vld [vmem:[%s1 + $0x8] sm:$0xf]
    %v26 = vld [vmem:[%s1 + $0xc] sm:$0xf]
    %v27 = vld [vmem:[%s1 + $0x10] sm:$0xf]
    %v28 = vld [vmem:[%s1 + $0x14] sm:$0xf]
    %v29 = vld [vmem:[#allocation4] sm:$0x1]
    %v31 = vlaneseq
    %v32 = vshrl.u32 %v31, 7
    %v33 = vsub.s32 0, %v32
    %v34 = vrot.slane %v29, %v33
    %v40 = vunpack.c.l.b16 %v19
    %v41 = vunpack.c.l.b16 %v20
    %v42 = vunpack.c.l.b16 %v21
    %v43 = vunpack.c.l.b16 %v22
    %v44 = vpack.c.b16 %v41, %v40
    %v45 = vpack.c.b16 %v43, %v42
    %v52 = vunpack.c.l.b16 %v23
    %v53 = vunpack.c.l.b16 %v24
    %v54 = vunpack.c.l.b16 %v25
    %v55 = vunpack.c.l.b16 %v26
    %v56 = vunpack.c.l.b16 %v27
    %v57 = vunpack.c.l.b16 %v28
    %v58 = vpack.c.b16 %v53, %v52
    %v59 = vpack.c.b16 %v55, %v54
    %v60 = vpack.c.b16 %v57, %v56
    %vm64 = vcmask 392192
    %v66 = vsel %vm64, %v44, 0
    %v69 = vsel %vm64, %v45, 0
    %71 = vmatprep.subr.bf16.mxu0 0
    %72 = vmatpush1.bf16.msra.mxu0 %v58
    %73 = vmatprep.subr.bf16.mxu0 0
    %74 = vmatpush1.bf16.msra.mxu0 %v59
    %75 = vmatprep.subr.bf16.mxu0 0
    %76 = vmatpush1.bf16.msra.mxu0 %v60
    %77 = vmatprep.subr.bf16.mxu0 0
    %78 = vmatpush1.bf16.msra.mxu0 0
    %79 = vmatprep.subr.bf16.mxu0 0
    %80 = vmatpush1.bf16.msra.mxu0 0
    %81 = vmatprep.subr.bf16.mxu0 0
    %82 = vmatpush1.bf16.msra.mxu0 0
    %83 = vmatprep.subr.bf16.mxu0 0
    %84 = vmatpush1.bf16.msra.mxu0 0
    %85 = vmatprep.subr.bf16.mxu0 0
    %86 = vmatpush1.bf16.msra.mxu0 0
    %87 = vmatprep.subr.bf16.mxu0 0
    %88 = vmatpush1.bf16.msra.mxu0 0
    %89 = vmatprep.subr.bf16.mxu0 0
    %90 = vmatpush1.bf16.msra.mxu0 0
    %91 = vmatprep.subr.bf16.mxu0 0
    %92 = vmatpush1.bf16.msra.mxu0 0
    %93 = vmatprep.subr.bf16.mxu0 0
    %94 = vmatpush1.bf16.msra.mxu0 0
    %95 = vmatprep.subr.bf16.mxu0 0
    %96 = vmatpush1.bf16.msra.mxu0 0
    %97 = vmatprep.subr.bf16.mxu0 0
    %98 = vmatpush1.bf16.msra.mxu0 0
    %99 = vmatprep.subr.bf16.mxu0 0
    %100 = vmatpush1.bf16.msra.mxu0 0
    %101 = vmatprep.subr.bf16.mxu0 0
    %102 = vmatpush1.bf16.msra.mxu0 0
    %103 = vmatprep.mubr.bf16.mxu0 0
    %104 = vmatmul.mubr.bf16.gmra.mrb[0].mxu0 %v66
    %v105 = vpop.f32.mrb[0].mxu0
    %v106 = vadd.f32 %v34, %v105
    %v107 = vpop.f32.mrb[0].mxu0
    %v108 = vpop.f32.mrb[0].mxu0
    %v109 = vadd.f32 %v34, %v108
    %v110 = vpop.f32.mrb[0].mxu0
    %111 = vmatprep.mubr.bf16.mxu0 0
    %112 = vmatmul.mubr.bf16.gmra.mrb[0].mxu0 %v69
    %v113 = vpop.f32.mrb[0].mxu0
    %v114 = vadd.f32 %v34, %v113
    %v115 = vpop.f32.mrb[0].mxu0
    %v116 = vpop.f32.mrb[0].mxu0
    %v117 = vadd.f32 %v34, %v116
    %v118 = vpop.f32.mrb[0].mxu0
    %119 = vdwg.mxu0
    %120 = vst [vmem:[#allocation2] sm:$0xff] %v106
    %121 = vst [vmem:[#allocation2 + $0x8] sm:$0xff] %v109
    %122 = vst [vmem:[#allocation2 + $0x10] sm:$0xff] %v114
    %123 = vst [vmem:[#allocation2 + $0x18] sm:$0xff] %v117
    // Predicated region
    $region14: #{patch_embed.2} parent=1 // pred_check
      _
    $region15: #{patch_embed.2} parent=1 // pred_check_branch
      %125 = sbr.rel (0) target = $region17
    $region16: #{patch_embed.2} parent=1 // pred_region
      %s127 = ssub.s32 512, 512
      %128 = vsyncadd [#allocation3], %s127
      %s129 = sshll.u32 [#allocation2], 4
      %s130 = int_to_ptr.vmem [resolvable:$true] %s129
      %135 = dma.vmem_to_hbm [thread:$0]  %s130, 512, %s3, [#allocation3], 128, 128, 8
    $region17: #{patch_embed.2} parent=1 // pred_fallthru
      _
    // Predicated region
    $region18: #{patch_embed.2} parent=1 // pred_check
      _
    $region19: #{patch_embed.2} parent=1 // pred_check_branch
      %137 = sbr.rel (0) target = $region21
    $region20: #{patch_embed.2} parent=1 // pred_region
      %138 = dma.done [#allocation3], 512
    $region21: #{patch_embed.2} parent=1 // pred_fallthru
      _
    %139 = vsyncpa [#allocation3], 1

</llo_original>
